<compile_context>
chip_gen: v5e
topology: v5e:2x2
jax: 0.10.0
libtpu: 0.0.40
codegen_flags: <defaults>
</compile_context>

<pallas_src>
import jax
import jax.numpy as jnp
from jax.experimental import pallas as pl
from jax.experimental.pallas import tpu as pltpu


def make_het_kernel(M, B, T, F, H):
    H2 = 2 * H
    inv_T = 1.0 / float(T)

    def kernel(x_ref, w1_ref, w2_ref, w3_ref, bias_ref, out_ref):
        # ---- mean over the sequence/time axis (PyTorch dim=1 per modality) ----
        x = x_ref[...]                              # (M, B, T, F)
        xm = jnp.sum(x, axis=2) * inv_T             # (M, B, F)

        # ---- packed biases: [b1 | b2 | b3] along the lane axis ----
        b1 = bias_ref[:, :, 0:H2]                   # (M, 1, 2H)
        b2 = bias_ref[:, :, H2:H2 + H]              # (M, 1, H)
        b3 = bias_ref[:, :, H2 + H:H2 + H + 1]      # (M, 1, 1)

        # ---- fc1 + (dropout = identity) + ReLU : batched over modalities ----
        h1 = jnp.einsum('mbf,mfh->mbh', xm, w1_ref[...],
                        preferred_element_type=jnp.float32) + b1
        h1 = jnp.maximum(h1, 0.0)

        # ---- fc2 + ReLU ----
        h2 = jnp.einsum('mbh,mhk->mbk', h1, w2_ref[...],
                        preferred_element_type=jnp.float32) + b2
        h2 = jnp.maximum(h2, 0.0)

        # ---- fc3 (nhid -> 1) as multiply + lane reduction, then sigmoid ----
        # w3_ref: (M, 1, H) broadcasts against h2: (M, B, H)
        h3 = jnp.sum(h2 * w3_ref[...], axis=-1, keepdims=True) + b3   # (M, B, 1)
        out_ref[...] = 1.0 / (1.0 + jnp.exp(-h3))

    return kernel


def het_forward(latent_emb_mod, params, mods):
    """latent_emb_mod: {mod: (B, T, F) f32} -> {mod: (B, 1) f32}.

    All modalities are stacked and processed in a single kernel invocation.
    (Assumes all modalities share the same input shape, as in the test below.)
    """
    x = jnp.stack([latent_emb_mod[m] for m in mods], axis=0)   # (M, B, T, F)
    M, B, T, F = x.shape
    H = params["w2"].shape[2]
    kernel = make_het_kernel(M, B, T, F, H)

    def full(shape):
        return pl.BlockSpec(shape, lambda i: (0,) * len(shape))

    out = pl.pallas_call(
        kernel,
        out_shape=jax.ShapeDtypeStruct((M, B, 1), jnp.float32),
        grid=(1,),                                   # single step: whole problem in VMEM
        in_specs=[
            full(x.shape),                           # stacked activations
            full(params["w1"].shape),                # (M, F, 2H)
            full(params["w2"].shape),                # (M, 2H, H)
            full(params["w3"].shape),                # (M, 1, H)
            full(params["bias"].shape),              # (M, 1, 2H + H + 1) packed biases
        ],
        out_specs=full((M, B, 1)),
    )(x, params["w1"], params["w2"], params["w3"], params["bias"])

    return {m: out[i] for i, m in enumerate(mods)}


def init_params(key, mods, nfeat=32, nhid=16):
    """Per-modality RefModel weights, stacked along a leading modality axis.

    PyTorch Linear weights are (out, in); fc1/fc2 are stored transposed for
    right-multiplication (x @ W). fc3 is kept as (1, nhid) per modality.
    """
    M = len(mods)
    H2 = 2 * nhid
    ks = jax.random.split(key, 6)
    scale = 0.1
    w1 = scale * jax.random.normal(ks[0], (M, nfeat, H2), jnp.float32)
    w2 = scale * jax.random.normal(ks[1], (M, H2, nhid), jnp.float32)
    w3 = scale * jax.random.normal(ks[2], (M, 1, nhid), jnp.float32)
    b1 = scale * jax.random.normal(ks[3], (M, 1, H2), jnp.float32)
    b2 = scale * jax.random.normal(ks[4], (M, 1, nhid), jnp.float32)
    b3 = scale * jax.random.normal(ks[5], (M, 1, 1), jnp.float32)
    bias = jnp.concatenate([b1, b2, b3], axis=-1)    # (M, 1, 2H + H + 1)
    return {"w1": w1, "w2": w2, "w3": w3, "bias": bias}


def ref_forward(latent_emb_mod, params, mods, nhid=16):
    """Pure-JAX reference mirroring the PyTorch HetModule forward (eval mode)."""
    H2 = 2 * nhid
    out = {}
    for i, m in enumerate(mods):
        x = jnp.mean(latent_emb_mod[m], axis=1)                       # (B, F)
        h1 = jnp.maximum(x @ params["w1"][i] + params["bias"][i, 0, :H2], 0.0)
        h2 = jnp.maximum(h1 @ params["w2"][i] + params["bias"][i, 0, H2:H2 + nhid], 0.0)
        h3 = h2 @ params["w3"][i].T + params["bias"][i, 0, H2 + nhid:]
        out[m] = 1.0 / (1.0 + jnp.exp(-h3))                           # (B, 1)
    return out


if __name__ == "__main__":
    MODS = ("rna", "atac")
    B, T, NFEAT, NHID = 2, 4, 32, 16

    key = jax.random.PRNGKey(0)
    k_param, k_x = jax.random.split(key)
    params = init_params(k_param, MODS, NFEAT, NHID)

    kxs = jax.random.split(k_x, len(MODS))
    latent = {m: jax.random.normal(kxs[i], (B, T, NFEAT), dtype=jnp.float32)
              for i, m in enumerate(MODS)}

    out = het_forward(latent, params, MODS)
    jax.block_until_ready(out)

    ref = ref_forward(latent, params, MODS, NHID)
    for m in MODS:
        assert out[m].shape == (B, 1)
        assert bool(jnp.all(jnp.isfinite(out[m])))
        assert bool(jnp.allclose(out[m], ref[m], atol=1e-4, rtol=1e-4))

    print("KERNEL_OK")
</pallas_src>

<mosaic_0001>
module attributes {stable_mosaic.version = 11 : i64} {
  func.func @kernel(%arg0: i32, %arg1: memref<2x2x4x32xf32, #tpu.memory_space<vmem>>, %arg2: memref<2x32x32xf32, #tpu.memory_space<vmem>>, %arg3: memref<2x32x16xf32, #tpu.memory_space<vmem>>, %arg4: memref<2x1x16xf32, #tpu.memory_space<vmem>>, %arg5: memref<2x1x49xf32, #tpu.memory_space<vmem>>, %arg6: memref<2x2x1xf32, #tpu.memory_space<vmem>>) attributes {dimension_semantics = [#tpu.dimension_semantics<arbitrary>], iteration_bounds = array<i64: 1>, scalar_prefetch = 0 : i64, scratch_operands = 0 : i64, tpu.core_type = #tpu.core_type<tc>, window_params = [{pipeline_mode = #tpu.pipeline_mode<synchronous>, transform_indices = @transform_0, window_bounds = array<i64: 2, 2, 4, 32>}, {pipeline_mode = #tpu.pipeline_mode<synchronous>, transform_indices = @transform_1, window_bounds = array<i64: 2, 32, 32>}, {pipeline_mode = #tpu.pipeline_mode<synchronous>, transform_indices = @transform_2, window_bounds = array<i64: 2, 32, 16>}, {pipeline_mode = #tpu.pipeline_mode<synchronous>, transform_indices = @transform_3, window_bounds = array<i64: 2, 1, 16>}, {pipeline_mode = #tpu.pipeline_mode<synchronous>, transform_indices = @transform_4, window_bounds = array<i64: 2, 1, 49>}, {pipeline_mode = #tpu.pipeline_mode<synchronous>, transform_indices = @transform_5, window_bounds = array<i64: 2, 2, 1>}]} {
    %c0 = arith.constant 0 : index
    %c0_0 = arith.constant 0 : index
    %c0_1 = arith.constant 0 : index
    %c0_2 = arith.constant 0 : index
    %0 = vector.load %arg1[%c0, %c0_0, %c0_1, %c0_2] : memref<2x2x4x32xf32, #tpu.memory_space<vmem>>, vector<2x2x4x32xf32>
    %cst = arith.constant dense<0.000000e+00> : vector<2x2x32xf32>
    %1 = vector.multi_reduction <add>, %0, %cst [2] : vector<2x2x4x32xf32> to vector<2x2x32xf32>
    %cst_3 = arith.constant 2.500000e-01 : f32
    %2 = vector.broadcast %cst_3 : f32 to vector<2x2x32xf32>
    %3 = arith.mulf %1, %2 : vector<2x2x32xf32>
    %c0_4 = arith.constant 0 : index
    %c0_5 = arith.constant 0 : index
    %c0_6 = arith.constant 0 : index
    %4 = vector.load %arg5[%c0_4, %c0_5, %c0_6] : memref<2x1x49xf32, #tpu.memory_space<vmem>>, vector<2x1x32xf32>
    %c0_7 = arith.constant 0 : index
    %c0_8 = arith.constant 0 : index
    %c32 = arith.constant 32 : index
    %5 = vector.load %arg5[%c0_7, %c0_8, %c32] : memref<2x1x49xf32, #tpu.memory_space<vmem>>, vector<2x1x16xf32>
    %c0_9 = arith.constant 0 : index
    %c0_10 = arith.constant 0 : index
    %c48 = arith.constant 48 : index
    %6 = vector.load %arg5[%c0_9, %c0_10, %c48] : memref<2x1x49xf32, #tpu.memory_space<vmem>>, vector<2x1x1xf32>
    %c0_11 = arith.constant 0 : index
    %c0_12 = arith.constant 0 : index
    %c0_13 = arith.constant 0 : index
    %7 = vector.load %arg2[%c0_11, %c0_12, %c0_13] : memref<2x32x32xf32, #tpu.memory_space<vmem>>, vector<2x32x32xf32>
    "tpu.trace_start"() <{level = 10 : i32, message = "mbf,mfh->mbh"}> : () -> ()
    %cst_14 = arith.constant dense<0.000000e+00> : vector<2x2x32xf32>
    %8 = tpu.matmul %3, %7, %cst_14 {dimension_numbers = #tpu.dot_dimension_numbers<[2], [1], [1], [2], [0, 0, 0, 1, 1, 2], [0], [0]>} : vector<2x2x32xf32>, vector<2x32x32xf32>, vector<2x2x32xf32> -> vector<2x2x32xf32>
    "tpu.trace_stop"() : () -> ()
    %9 = vector.broadcast %4 : vector<2x1x32xf32> to vector<2x2x32xf32>
    %10 = arith.addf %8, %9 : vector<2x2x32xf32>
    %cst_15 = arith.constant 0.000000e+00 : f32
    %11 = vector.broadcast %cst_15 : f32 to vector<2x2x32xf32>
    %12 = arith.maximumf %10, %11 : vector<2x2x32xf32>
    %c0_16 = arith.constant 0 : index
    %c0_17 = arith.constant 0 : index
    %c0_18 = arith.constant 0 : index
    %13 = vector.load %arg3[%c0_16, %c0_17, %c0_18] : memref<2x32x16xf32, #tpu.memory_space<vmem>>, vector<2x32x16xf32>
    "tpu.trace_start"() <{level = 10 : i32, message = "mbh,mhk->mbk"}> : () -> ()
    %cst_19 = arith.constant dense<0.000000e+00> : vector<2x2x16xf32>
    %14 = tpu.matmul %12, %13, %cst_19 {dimension_numbers = #tpu.dot_dimension_numbers<[2], [1], [1], [2], [0, 0, 0, 1, 1, 2], [0], [0]>} : vector<2x2x32xf32>, vector<2x32x16xf32>, vector<2x2x16xf32> -> vector<2x2x16xf32>
    "tpu.trace_stop"() : () -> ()
    %15 = vector.broadcast %5 : vector<2x1x16xf32> to vector<2x2x16xf32>
    %16 = arith.addf %14, %15 : vector<2x2x16xf32>
    %cst_20 = arith.constant 0.000000e+00 : f32
    %17 = vector.broadcast %cst_20 : f32 to vector<2x2x16xf32>
    %18 = arith.maximumf %16, %17 : vector<2x2x16xf32>
    %c0_21 = arith.constant 0 : index
    %c0_22 = arith.constant 0 : index
    %c0_23 = arith.constant 0 : index
    %19 = vector.load %arg4[%c0_21, %c0_22, %c0_23] : memref<2x1x16xf32, #tpu.memory_space<vmem>>, vector<2x1x16xf32>
    %20 = vector.broadcast %19 : vector<2x1x16xf32> to vector<2x2x16xf32>
    %21 = arith.mulf %18, %20 : vector<2x2x16xf32>
    %cst_24 = arith.constant dense<0.000000e+00> : vector<2x2xf32>
    %22 = vector.multi_reduction <add>, %21, %cst_24 [2] : vector<2x2x16xf32> to vector<2x2xf32>
    %23 = vector.shape_cast %22 : vector<2x2xf32> to vector<2x2x1xf32>
    %24 = vector.broadcast %6 : vector<2x1x1xf32> to vector<2x2x1xf32>
    %25 = arith.addf %23, %24 : vector<2x2x1xf32>
    %cst_25 = arith.constant 0.000000e+00 : f32
    %26 = vector.broadcast %cst_25 : f32 to vector<2x2x1xf32>
    %27 = arith.subf %26, %25 : vector<2x2x1xf32>
    %28 = math.exp %27 : vector<2x2x1xf32>
    %cst_26 = arith.constant 1.000000e+00 : f32
    %29 = vector.broadcast %cst_26 : f32 to vector<2x2x1xf32>
    %30 = arith.addf %29, %28 : vector<2x2x1xf32>
    %cst_27 = arith.constant 1.000000e+00 : f32
    %31 = vector.broadcast %cst_27 : f32 to vector<2x2x1xf32>
    %32 = arith.divf %31, %30 : vector<2x2x1xf32>
    %c0_28 = arith.constant 0 : index
    %c0_29 = arith.constant 0 : index
    %c0_30 = arith.constant 0 : index
    %33 = vector.load %arg6[%c0_28, %c0_29, %c0_30] : memref<2x2x1xf32, #tpu.memory_space<vmem>>, vector<2x2x1xf32>
    tpu.vector_store %arg6[%c0_28, %c0_29, %c0_30], %32 {strides = array<i32>} : memref<2x2x1xf32, #tpu.memory_space<vmem>>, vector<2x2x1xf32>,
    return
  }
  func.func @transform_0(%arg0: i32) -> (i32, i32, i32, i32) {
    %c0_i32 = arith.constant 0 : i32
    %c0_i32_0 = arith.constant 0 : i32
    %c0_i32_1 = arith.constant 0 : i32
    %c0_i32_2 = arith.constant 0 : i32
    %c0_i32_3 = arith.constant 0 : i32
    return %c0_i32, %c0_i32_0, %c0_i32_1, %c0_i32_2 : i32, i32, i32, i32
  }
  func.func @transform_1(%arg0: i32) -> (i32, i32, i32) {
    %c0_i32 = arith.constant 0 : i32
    %c0_i32_0 = arith.constant 0 : i32
    %c0_i32_1 = arith.constant 0 : i32
    %c0_i32_2 = arith.constant 0 : i32
    return %c0_i32, %c0_i32_0, %c0_i32_1 : i32, i32, i32
  }
  func.func @transform_2(%arg0: i32) -> (i32, i32, i32) {
    %c0_i32 = arith.constant 0 : i32
    %c0_i32_0 = arith.constant 0 : i32
    %c0_i32_1 = arith.constant 0 : i32
    %c0_i32_2 = arith.constant 0 : i32
    return %c0_i32, %c0_i32_0, %c0_i32_1 : i32, i32, i32
  }
  func.func @transform_3(%arg0: i32) -> (i32, i32, i32) {
    %c0_i32 = arith.constant 0 : i32
    %c0_i32_0 = arith.constant 0 : i32
    %c0_i32_1 = arith.constant 0 : i32
    %c0_i32_2 = arith.constant 0 : i32
    return %c0_i32, %c0_i32_0, %c0_i32_1 : i32, i32, i32
  }
  func.func @transform_4(%arg0: i32) -> (i32, i32, i32) {
    %c0_i32 = arith.constant 0 : i32
    %c0_i32_0 = arith.constant 0 : i32
    %c0_i32_1 = arith.constant 0 : i32
    %c0_i32_2 = arith.constant 0 : i32
    return %c0_i32, %c0_i32_0, %c0_i32_1 : i32, i32, i32
  }
  func.func @transform_5(%arg0: i32) -> (i32, i32, i32) {
    %c0_i32 = arith.constant 0 : i32
    %c0_i32_0 = arith.constant 0 : i32
    %c0_i32_1 = arith.constant 0 : i32
    %c0_i32_2 = arith.constant 0 : i32
    return %c0_i32, %c0_i32_0, %c0_i32_1 : i32, i32, i32
  }
}

</mosaic_0001>

<llo_original>
// kernel: tpu_custom_call.1
$region0: #{tpu_custom_call.1}
  #allocation0 [shape = 'u32[]', space=smem, size = 0x4, offset = 0x4, fixed_abs, tag = 'smem constant byte address 0x4 - core index']
  #allocation1 [shape = 'u32[72,128]{1,0:T(1,128)}', space=vmem, size = 0x9000, scoped, tag = 'internal scratch']
  %s0 = inlined_call_operand.vmem [shape: f32[2,2,4,32], index: 0, kind: input, shape index: {}]
  %s1 = inlined_call_operand.vmem [shape: f32[2,32,32], index: 1, kind: input, shape index: {}]
  %s2 = inlined_call_operand.vmem [shape: f32[2,32,16], index: 2, kind: input, shape index: {}]
  %s3 = inlined_call_operand.vmem [shape: f32[2,1,16], index: 3, kind: input, shape index: {}]
  %s4 = inlined_call_operand.vmem [shape: f32[2,1,49], index: 4, kind: input, shape index: {}]
  %s5 = inlined_call_operand.vmem [shape: f32[2,2,1], index: 5, kind: output, shape index: {}]
  %s6 = sld [smem:[#allocation0]]
  $region30: #{tpu_custom_call.1} parent=0
    _
  %s8 = ssub.s32 1, %s6
  %s9 = scalar_select 0, %s8, %s6
  // Predicated region
  $region2: #{tpu_custom_call.1} parent=0 // pred_check
    _
  $region3: #{tpu_custom_call.1} parent=0 // pred_check_branch
    %11 = sbr.rel (0) target = $region5
  $region4: #{tpu_custom_call.1} parent=0 // pred_region
    _
  $region5: #{tpu_custom_call.1} parent=0 // pred_fallthru
    _
  // Predicated region
  $region6: #{tpu_custom_call.1} parent=0 // pred_check
    _
  $region7: #{tpu_custom_call.1} parent=0 // pred_check_branch
    %13 = sbr.rel (0) target = $region9
  $region8: #{tpu_custom_call.1} parent=0 // pred_region
    _
  $region9: #{tpu_custom_call.1} parent=0 // pred_fallthru
    _
  // Predicated region
  $region10: #{tpu_custom_call.1} parent=0 // pred_check
    _
  $region11: #{tpu_custom_call.1} parent=0 // pred_check_branch
    %15 = sbr.rel (0) target = $region13
  $region12: #{tpu_custom_call.1} parent=0 // pred_region
    _
  $region13: #{tpu_custom_call.1} parent=0 // pred_fallthru
    _
  // Predicated region
  $region14: #{tpu_custom_call.1} parent=0 // pred_check
    _
  $region15: #{tpu_custom_call.1} parent=0 // pred_check_branch
    %17 = sbr.rel (0) target = $region17
  $region16: #{tpu_custom_call.1} parent=0 // pred_region
    _
  $region17: #{tpu_custom_call.1} parent=0 // pred_fallthru
    _
  // Predicated region
  $region18: #{tpu_custom_call.1} parent=0 // pred_check
    _
  $region19: #{tpu_custom_call.1} parent=0 // pred_check_branch
    %19 = sbr.rel (0) target = $region21
  $region20: #{tpu_custom_call.1} parent=0 // pred_region
    _
  $region21: #{tpu_custom_call.1} parent=0 // pred_fallthru
    _
  %v20 = vld [vmem:[%s0] sm:$0xf]
  %v21 = vld [vmem:[%s0 + $0x4] sm:$0xf]
  %v22 = vld [vmem:[%s0 + $0x8] sm:$0xf]
  %v23 = vld [vmem:[%s0 + $0xc] sm:$0xf]
  %vm24 = vcmask 257024
  %v25 = vsel %vm24, %v20, 0.0
  %v26 = vrot.slane %v25, 4
  %v27 = vadd.f32 %v25, %v26
  %v28 = vrot.slane %v27, 2
  %v29 = vadd.f32 %v27, %v28
  %v30 = vrot.slane %v29, 1
  %v31 = vadd.f32 %v29, %v30
  %v32 = vsel %vm24, %v21, 0.0
  %v33 = vrot.slane %v32, 4
  %v34 = vadd.f32 %v32, %v33
  %v35 = vrot.slane %v34, 2
  %v36 = vadd.f32 %v34, %v35
  %v37 = vrot.slane %v36, 1
  %v38 = vadd.f32 %v36, %v37
  %v39 = vsel %vm24, %v22, 0.0
  %v40 = vrot.slane %v39, 4
  %v41 = vadd.f32 %v39, %v40
  %v42 = vrot.slane %v41, 2
  %v43 = vadd.f32 %v41, %v42
  %v44 = vrot.slane %v43, 1
  %v45 = vadd.f32 %v43, %v44
  %v46 = vsel %vm24, %v23, 0.0
  %v47 = vrot.slane %v46, 4
  %v48 = vadd.f32 %v46, %v47
  %v49 = vrot.slane %v48, 2
  %v50 = vadd.f32 %v48, %v49
  %v51 = vrot.slane %v50, 1
  %v52 = vadd.f32 %v50, %v51
  %v53 = vmul.f32 %v31, 0.25
  %v54 = vmul.f32 %v38, 0.25
  %v55 = vmul.f32 %v45, 0.25
  %v56 = vmul.f32 %v52, 0.25
  %v57 = vld [vmem:[%s4] sm:$0x1]
  %v58 = vld [vmem:[%s4 + $0x1] sm:$0x1]
  %v59 = vld [vmem:[%s1] sm:$0xff]
  %v60 = vld [vmem:[%s1 + $0x8] sm:$0xff]
  %v61 = vld [vmem:[%s1 + $0x10] sm:$0xff]
  %v62 = vld [vmem:[%s1 + $0x18] sm:$0xff]
  %v63 = vld [vmem:[%s1 + $0x20] sm:$0xff]
  %v64 = vld [vmem:[%s1 + $0x28] sm:$0xff]
  %v65 = vld [vmem:[%s1 + $0x30] sm:$0xff]
  %v66 = vld [vmem:[%s1 + $0x38] sm:$0xff]
  %v69 = vperm.slane %v57, 0
  %v70 = vperm.slane %v58, 0
  %vm75 = vcmask 1041409
  %v76 = vsel %vm75, %v54, %v53
  %vm77 = vcmask 261120
  %v78 = vsel %vm77, %v76, 0
  %80 = vmatpush.msra.mxu0 0.0
  %81 = vmatpush.msra.mxu0 0.0
  %82 = vmatpush.msra.mxu0 0.0
  %83 = vmatpush.msra.mxu0 0.0
  %84 = vmatpush.msra.mxu0 0.0
  %85 = vmatpush.msra.mxu0 0.0
  %86 = vmatpush.msra.mxu0 0.0
  %87 = vmatpush.msra.mxu0 0.0
  %88 = vmatpush.msra.mxu0 0.0
  %89 = vmatpush.msra.mxu0 0.0
  %90 = vmatpush.msra.mxu0 0.0
  %91 = vmatpush.msra.mxu0 0.0
  %92 = vmatpush.msra.mxu0 %v62
  %93 = vmatpush.msra.mxu0 %v61
  %94 = vmatpush.msra.mxu0 %v60
  %95 = vmatpush.msra.mxu0 %v59
  %96 = vmatmul.f32.gmra.mxu0 %v78
  %v97 = vpop.f32.mrf.mxu0
  %v98 = vadd.f32 %v69, %v97
  %99 = vdwg.mxu0
  %v102 = vsel %vm75, %v56, %v55
  %v103 = vsel %vm77, %v102, 0
  %105 = vmatpush.msra.mxu0 0.0
  %106 = vmatpush.msra.mxu0 0.0
  %107 = vmatpush.msra.mxu0 0.0
  %108 = vmatpush.msra.mxu0 0.0
  %109 = vmatpush.msra.mxu0 0.0
  %110 = vmatpush.msra.mxu0 0.0
  %111 = vmatpush.msra.mxu0 0.0
  %112 = vmatpush.msra.mxu0 0.0
  %113 = vmatpush.msra.mxu0 0.0
  %114 = vmatpush.msra.mxu0 0.0
  %115 = vmatpush.msra.mxu0 0.0
  %116 = vmatpush.msra.mxu0 0.0
  %117 = vmatpush.msra.mxu0 %v66
  %118 = vmatpush.msra.mxu0 %v65
  %119 = vmatpush.msra.mxu0 %v64
  %120 = vmatpush.msra.mxu0 %v63
  %121 = vmatmul.f32.gmra.mxu0 %v103
  %v122 = vpop.f32.mrf.mxu0
  %v123 = vadd.f32 %v70, %v122
  %124 = vdwg.mxu0
  %v125 = vmax.f32 %v98, 0.0
  %v126 = vmax.f32 %v123, 0.0
  %v127 = vld [vmem:[%s2] sm:$0xff]
  %v128 = vld [vmem:[%s2 + $0x8] sm:$0xff]
  %v129 = vld [vmem:[%s2 + $0x10] sm:$0xff]
  %v130 = vld [vmem:[%s2 + $0x18] sm:$0xff]
  %v131 = vld [vmem:[%s2 + $0x20] sm:$0xff]
  %v132 = vld [vmem:[%s2 + $0x28] sm:$0xff]
  %v133 = vld [vmem:[%s2 + $0x30] sm:$0xff]
  %v134 = vld [vmem:[%s2 + $0x38] sm:$0xff]
  %135 = vrot.lane.b32.xlu0 %v69, 96
  %v136 = vpop.permute.xlu0 %135
  %v139 = vsel %vm77, %v125, 0
  %141 = vmatpush.msra.mxu0 0.0
  %142 = vmatpush.msra.mxu0 0.0
  %143 = vmatpush.msra.mxu0 0.0
  %144 = vmatpush.msra.mxu0 0.0
  %145 = vmatpush.msra.mxu0 0.0
  %146 = vmatpush.msra.mxu0 0.0
  %147 = vmatpush.msra.mxu0 0.0
  %148 = vmatpush.msra.mxu0 0.0
  %149 = vmatpush.msra.mxu0 0.0
  %150 = vmatpush.msra.mxu0 0.0
  %151 = vmatpush.msra.mxu0 0.0
  %152 = vmatpush.msra.mxu0 0.0
  %153 = vmatpush.msra.mxu0 %v130
  %154 = vmatpush.msra.mxu0 %v129
  %155 = vmatpush.msra.mxu0 %v128
  %156 = vmatpush.msra.mxu0 %v127
  %157 = vmatmul.f32.gmra.mxu0 %v139
  %v158 = vpop.f32.mrf.mxu0
  %v159 = vadd.f32 %v136, %v158
  %160 = vdwg.mxu0
  %161 = vrot.lane.b32.xlu0 %v70, 96
  %v162 = vpop.permute.xlu0 %161
  %v165 = vsel %vm77, %v126, 0
  %167 = vmatpush.msra.mxu0 0.0
  %168 = vmatpush.msra.mxu0 0.0
  %169 = vmatpush.msra.mxu0 0.0
  %170 = vmatpush.msra.mxu0 0.0
  %171 = vmatpush.msra.mxu0 0.0
  %172 = vmatpush.msra.mxu0 0.0
  %173 = vmatpush.msra.mxu0 0.0
  %174 = vmatpush.msra.mxu0 0.0
  %175 = vmatpush.msra.mxu0 0.0
  %176 = vmatpush.msra.mxu0 0.0
  %177 = vmatpush.msra.mxu0 0.0
  %178 = vmatpush.msra.mxu0 0.0
  %179 = vmatpush.msra.mxu0 %v134
  %180 = vmatpush.msra.mxu0 %v133
  %181 = vmatpush.msra.mxu0 %v132
  %182 = vmatpush.msra.mxu0 %v131
  %183 = vmatmul.f32.gmra.mxu0 %v165
  %v184 = vpop.f32.mrf.mxu0
  %v185 = vadd.f32 %v162, %v184
  %186 = vdwg.mxu0
  %v187 = vmax.f32 %v159, 0.0
  %v188 = vmax.f32 %v185, 0.0
  %v189 = vld [vmem:[%s3] sm:$0x1]
  %v190 = vld [vmem:[%s3 + $0x1] sm:$0x1]
  %v193 = vperm.slane %v189, 0
  %v194 = vperm.slane %v190, 0
  %v197 = vmul.f32 %v187, %v193
  %v198 = vmul.f32 %v188, %v194
  %vm199 = vcmask 123904
  %v200 = vsel %vm199, %v197, 0.0
  %201 = vadd.xlane.f32.xlu0 %v200
  %v202 = vpop.xlane.xlu0 %201
  %v203 = vsel %vm199, %v198, 0.0
  %204 = vadd.xlane.f32.xlu0 %v203
  %v205 = vpop.xlane.xlu0 %204
  %v206 = vadd.f32 %v202, %v69
  %v207 = vadd.f32 %v205, %v70
  %v208 = vsub.f32 0.0, %v206
  %v209 = vsub.f32 0.0, %v207
  %v210 = vmul.f32 %v208, 1.442695
  %v211 = vpow.pop %v210
  %v212 = vmul.f32 %v209, 1.442695
  %v213 = vpow.pop %v212
  %v214 = vadd.f32 %v211, 1.0
  %v215 = vadd.f32 %v213, 1.0
  %v216 = vrcp.pop %v214
  %v217 = vmul.f32 %v214, %v216
  %v218 = vsub.f32 1.0, %v217
  %v219 = vmul.f32 %v216, %v218
  %v220 = vadd.f32 %v216, %v219
  %vm221 = vweird.f32 %v214
  %vm222 = vweird.f32 %v216
  %vm223 = vmor %vm221, %vm222
  %v224 = vsel %vm223, %v216, %v220
  %v225 = vand.u32 2147483647, %v214
  %vm226 = vcmp.eq.f32.partialorder %v225, 8.507059e+37
  %v227 = vand.u32 %v214, 2147483648
  %v228 = vor.u32 1.1754944e-38, %v227
  %v229 = vsel %vm226, %v228, %v224
  %v230 = vmul.f32 1.0, %v229
  %v231 = vrcp.pop %v215
  %v232 = vmul.f32 %v215, %v231
  %v233 = vsub.f32 1.0, %v232
  %v234 = vmul.f32 %v231, %v233
  %v235 = vadd.f32 %v231, %v234
  %vm236 = vweird.f32 %v215
  %vm237 = vweird.f32 %v231
  %vm238 = vmor %vm236, %vm237
  %v239 = vsel %vm238, %v231, %v235
  %v240 = vand.u32 2147483647, %v215
  %vm241 = vcmp.eq.f32.partialorder %v240, 8.507059e+37
  %v242 = vand.u32 %v215, 2147483648
  %v243 = vor.u32 1.1754944e-38, %v242
  %v244 = vsel %vm241, %v243, %v239
  %v245 = vmul.f32 1.0, %v244
  %248 = vrot.lane.b32.xlu0 %v230, 80
  %v249 = vpop.permute.xlu0 %248
  %250 = vrot.lane.b32.xlu0 %v245, 80
  %v251 = vpop.permute.xlu0 %250
  %vm254 = vcmask 1024
  %255 = vst.msk [vmem:[%s5] sm:$0x3] %vm254, %v249
  %256 = vst.msk [vmem:[%s5 + $0x2] sm:$0x3] %vm254, %v251
  // Predicated region
  $region22: #{tpu_custom_call.1} parent=0 // pred_check
    _
  $region23: #{tpu_custom_call.1} parent=0 // pred_check_branch
    %258 = sbr.rel (0) target = $region25
  $region24: #{tpu_custom_call.1} parent=0 // pred_region
    _
  $region25: #{tpu_custom_call.1} parent=0 // pred_fallthru
    _
  // Predicated region
  $region26: #{tpu_custom_call.1} parent=0 // pred_check
    _
  $region27: #{tpu_custom_call.1} parent=0 // pred_check_branch
    %260 = sbr.rel (0) target = $region29
  $region28: #{tpu_custom_call.1} parent=0 // pred_region
    _
  $region29: #{tpu_custom_call.1} parent=0 // pred_fallthru
    _

</llo_original>
